<compile_context>
chip_gen: v7x
topology: tpu7x:2x2x1
jax: 0.10.0
libtpu: 0.0.40
codegen_flags: <defaults>
</compile_context>

<pallas_src>
import jax
import jax.numpy as jnp
from jax import lax
from jax.experimental import pallas as pl
from jax.experimental.pallas import tpu as pltpu


def attention_kernel(enc_ref, h_ref, w_ref, bv_ref, o_ref):
    """enc: [src_len, enc_hid], h: [1, dec_hid],
    w:  [dec_hid, dec_hid+enc_hid]  (PyTorch attn.weight; cat order = (hidden, enc)),
    bv: [dec_hid, 2]                (col 0 = attn bias, col 1 = v weight),
    o:  [1, src_len]."""
    dec_hid = h_ref.shape[1]

    # PyTorch cat order is (hidden, encoder_outputs), so attn.weight columns
    # [:dec_hid] multiply the hidden state and [dec_hid:] the encoder outputs.
    w_h = w_ref[:, :dec_hid]                 # [dec_hid, dec_hid]
    w_e = w_ref[:, dec_hid:]                 # [dec_hid, enc_hid]
    b_col = bv_ref[:, 0:1]                   # [dec_hid, 1]
    v_col = bv_ref[:, 1:2]                   # [dec_hid, 1]

    # Hidden projection (rank-1 term, shared by every src position):
    # VPU multiply + lane reduce -> [dec_hid, 1]
    hb = jnp.sum(w_h * h_ref[...], axis=1, keepdims=True) + b_col

    # energy^T = tanh(W_e · enc^T + hb): contract the shared enc_hid (last) axes
    # directly -> [dec_hid, src_len] with src_len on the lane axis.  One MXU pass,
    # no activation transpose anywhere.
    e_t = lax.dot_general(
        w_e, enc_ref[...],
        dimension_numbers=(((1,), (1,)), ((), ())),
        preferred_element_type=jnp.float32,
    )
    energy_t = jnp.tanh(e_t + hb)            # [dec_hid, src_len]

    # v projection: VPU multiply + sublane reduce -> lane-dense scores row.
    scores = jnp.sum(energy_t * v_col, axis=0, keepdims=True)   # [1, src_len]

    # Numerically-stable softmax over the lane (src_len) axis.
    m = jnp.max(scores, axis=1, keepdims=True)
    e = jnp.exp(scores - m)
    o_ref[...] = e / jnp.sum(e, axis=1, keepdims=True)          # [1, src_len]


def prepare_attention_params(w_attn, b_attn, w_v):
    """One-time parameter packing (call at model init, NOT per decoder step).

    w_attn: [dec_hid, enc_hid+dec_hid] (PyTorch attn.weight, used as-is)
    b_attn: [dec_hid]                  (PyTorch attn.bias)
    w_v:    [1, dec_hid]               (PyTorch v.weight)
    Returns (w_attn, bv) with bv: [dec_hid, 2] packing bias and v as columns.
    """
    bv = jnp.stack([b_attn, w_v[0]], axis=1).astype(jnp.float32)  # [dec_hid, 2]
    return w_attn.astype(jnp.float32), bv


def attention_forward(hidden, encoder_outputs, w_attn, bv):
    """hidden: [n_layers, 1, dec_hid], encoder_outputs: [1, src_len, enc_hid]."""
    B, src_len, enc_hid = encoder_outputs.shape
    assert B == 1, "PyTorch reference only type-checks for batch_size == 1"
    assert hidden.shape[0] >= 3, "forward reads hidden[2]: needs n_layers >= 3"
    dec_hid = hidden.shape[-1]
    assert w_attn.shape == (dec_hid, enc_hid + dec_hid)
    assert bv.shape == (dec_hid, 2)

    # Per-call glue kept minimal: zero-cost slices only.
    h = hidden[2]                                            # [1, dec_hid]
    enc = encoder_outputs[0]                                 # [src_len, enc_hid]

    vmem = pl.BlockSpec(memory_space=pltpu.MemorySpace.VMEM)
    out = pl.pallas_call(
        attention_kernel,
        out_shape=jax.ShapeDtypeStruct((1, src_len), jnp.float32),
        in_specs=[vmem, vmem, vmem, vmem],
        out_specs=vmem,
    )(enc, h, w_attn, bv)
    # TODO(synk): if src_len / hidden dims grow beyond a few vregs, add a
    # 'parallel' src_len grid axis with 128-lane tiles and a two-pass softmax.

    return out                                               # [1, src_len]


def attention_reference(hidden, encoder_outputs, w_attn, b_attn, w_v):
    """Pure-JAX reference that mirrors the PyTorch forward exactly."""
    B, src_len, _ = encoder_outputs.shape
    h = hidden[2:3, :, :]                                    # [1, 1, dec_hid]
    h = jnp.tile(h, (1, src_len, 1))                         # [1, src_len, dec_hid]
    cat = jnp.concatenate([h, encoder_outputs], axis=2)      # [1, src_len, enc+dec]
    energy = jnp.tanh(cat @ w_attn.T + b_attn)               # [1, src_len, dec_hid]
    attention = (energy @ w_v.T)[..., 0]                     # [1, src_len]
    return jax.nn.softmax(attention, axis=1)


if __name__ == "__main__":
    enc_hid_dim = 32
    dec_hid_dim = 32
    src_len = 8
    n_layers = 4
    batch = 1

    key = jax.random.PRNGKey(0)
    k1, k2, k3, k4, k5 = jax.random.split(key, 5)

    # deterministic synthetic parameters (PyTorch Linear shapes)
    w_attn = 0.1 * jax.random.normal(
        k1, (dec_hid_dim, enc_hid_dim + dec_hid_dim), jnp.float32)
    b_attn = 0.1 * jax.random.normal(k2, (dec_hid_dim,), jnp.float32)
    w_v = 0.1 * jax.random.normal(k3, (1, dec_hid_dim), jnp.float32)

    # inputs
    hidden = jax.random.normal(k4, (n_layers, batch, dec_hid_dim), jnp.float32)
    encoder_outputs = jax.random.normal(
        k5, (batch, src_len, enc_hid_dim), jnp.float32)

    # one-time parameter packing (model init)
    w_packed, bv_packed = prepare_attention_params(w_attn, b_attn, w_v)

    fwd = jax.jit(attention_forward)
    out = fwd(hidden, encoder_outputs, w_packed, bv_packed)
    out = jax.block_until_ready(out)

    ref = attention_reference(hidden, encoder_outputs, w_attn, b_attn, w_v)
    assert out.shape == (batch, src_len)
    assert jnp.allclose(out, ref, atol=1e-5, rtol=1e-4)
    assert jnp.allclose(jnp.sum(out, axis=1), 1.0, atol=1e-5)

    print("KERNEL_OK")
</pallas_src>

<mosaic_0001>
module attributes {stable_mosaic.version = 11 : i64} {
  func.func @attention_kernel(%arg0: memref<8x32xf32, #tpu.memory_space<vmem>>, %arg1: memref<1x32xf32, #tpu.memory_space<vmem>>, %arg2: memref<32x64xf32, #tpu.memory_space<vmem>>, %arg3: memref<32x2xf32, #tpu.memory_space<vmem>>, %arg4: memref<1x8xf32, #tpu.memory_space<vmem>>) attributes {dimension_semantics = [], scalar_prefetch = 0 : i64, scratch_operands = 0 : i64, tpu.core_type = #tpu.core_type<tc>} {
    %c0 = arith.constant 0 : index
    %c0_0 = arith.constant 0 : index
    %0 = vector.load %arg2[%c0, %c0_0] : memref<32x64xf32, #tpu.memory_space<vmem>>, vector<32x32xf32>
    %c0_1 = arith.constant 0 : index
    %c32 = arith.constant 32 : index
    %1 = vector.load %arg2[%c0_1, %c32] : memref<32x64xf32, #tpu.memory_space<vmem>>, vector<32x32xf32>
    %c0_2 = arith.constant 0 : index
    %c0_3 = arith.constant 0 : index
    %2 = vector.load %arg3[%c0_2, %c0_3] : memref<32x2xf32, #tpu.memory_space<vmem>>, vector<32x1xf32>
    %c0_4 = arith.constant 0 : index
    %c1 = arith.constant 1 : index
    %3 = vector.load %arg3[%c0_4, %c1] : memref<32x2xf32, #tpu.memory_space<vmem>>, vector<32x1xf32>
    %c0_5 = arith.constant 0 : index
    %c0_6 = arith.constant 0 : index
    %4 = vector.load %arg1[%c0_5, %c0_6] : memref<1x32xf32, #tpu.memory_space<vmem>>, vector<1x32xf32>
    %5 = vector.broadcast %4 : vector<1x32xf32> to vector<32x32xf32>
    %6 = arith.mulf %0, %5 : vector<32x32xf32>
    %cst = arith.constant dense<0.000000e+00> : vector<32xf32>
    %7 = vector.multi_reduction <add>, %6, %cst [1] : vector<32x32xf32> to vector<32xf32>
    %8 = vector.shape_cast %7 : vector<32xf32> to vector<32x1xf32>
    %9 = arith.addf %8, %2 : vector<32x1xf32>
    %c0_7 = arith.constant 0 : index
    %c0_8 = arith.constant 0 : index
    %10 = vector.load %arg0[%c0_7, %c0_8] : memref<8x32xf32, #tpu.memory_space<vmem>>, vector<8x32xf32>
    %cst_9 = arith.constant dense<0.000000e+00> : vector<32x8xf32>
    %11 = tpu.matmul %1, %10, %cst_9 {dimension_numbers = #tpu.dot_dimension_numbers<[1], [1], [0], [0], [0, 0, 1, 0], [], []>} : vector<32x32xf32>, vector<8x32xf32>, vector<32x8xf32> -> vector<32x8xf32>
    %12 = vector.broadcast %9 : vector<32x1xf32> to vector<32x8xf32>
    %13 = arith.addf %11, %12 : vector<32x8xf32>
    %14 = math.tanh %13 : vector<32x8xf32>
    %15 = vector.broadcast %3 : vector<32x1xf32> to vector<32x8xf32>
    %16 = arith.mulf %14, %15 : vector<32x8xf32>
    %cst_10 = arith.constant dense<0.000000e+00> : vector<8xf32>
    %17 = vector.multi_reduction <add>, %16, %cst_10 [0] : vector<32x8xf32> to vector<8xf32>
    %18 = vector.shape_cast %17 : vector<8xf32> to vector<1x8xf32>
    %cst_11 = arith.constant dense<0xFF800000> : vector<1xf32>
    %19 = vector.multi_reduction <maximumf>, %18, %cst_11 [1] : vector<1x8xf32> to vector<1xf32>
    %20 = vector.shape_cast %19 : vector<1xf32> to vector<1x1xf32>
    %21 = vector.broadcast %20 : vector<1x1xf32> to vector<1x8xf32>
    %22 = arith.subf %18, %21 : vector<1x8xf32>
    %23 = math.exp %22 : vector<1x8xf32>
    %cst_12 = arith.constant dense<0.000000e+00> : vector<1xf32>
    %24 = vector.multi_reduction <add>, %23, %cst_12 [1] : vector<1x8xf32> to vector<1xf32>
    %25 = vector.shape_cast %24 : vector<1xf32> to vector<1x1xf32>
    %26 = vector.broadcast %25 : vector<1x1xf32> to vector<1x8xf32>
    %27 = arith.divf %23, %26 : vector<1x8xf32>
    %c0_13 = arith.constant 0 : index
    %c0_14 = arith.constant 0 : index
    %28 = vector.load %arg4[%c0_13, %c0_14] : memref<1x8xf32, #tpu.memory_space<vmem>>, vector<1x8xf32>
    tpu.vector_store %arg4[%c0_13, %c0_14], %27 {strides = array<i32>} : memref<1x8xf32, #tpu.memory_space<vmem>>, vector<1x8xf32>,
    return
  }
}

</mosaic_0001>

<llo_original>
// kernel: attention_forward.1
$region0: #{attention_forward.1}
  #allocation0 [shape = 'u32[]', space=smem, size = 0x4, offset = 0x4, fixed_abs, tag = 'smem constant byte address 0x4 - core index']
  #allocation1 [shape = 'u32[144,128]{1,0:T(1,128)}', space=vmem, size = 0x12000, scoped, tag = 'internal scratch']
  %s0 = inlined_call_operand.vmem [shape: f32[8,32], index: 0, kind: input, shape index: {}]
  %s1 = inlined_call_operand.vmem [shape: f32[1,32], index: 1, kind: input, shape index: {}]
  %s2 = inlined_call_operand.vmem [shape: f32[32,64], index: 2, kind: input, shape index: {}]
  %s3 = inlined_call_operand.vmem [shape: f32[32,2], index: 3, kind: input, shape index: {}]
  %s4 = inlined_call_operand.hbm [shape: f32[1,8], index: 4, kind: output, shape index: {}]
  %s5 = sld [smem:[#allocation0]]
  $region26: #{attention_forward.1} parent=0
    _
  %s7 = ssub.s32 1, %s5
  %s8 = scalar_select 0, %s7, %s5
  $region1: #{attention_forward.1} parent=0
    #allocation2 [shape = 'u8[512]{0}', space=vmem, size = 0x400, scoped, tag = 'output window, operand 0, single buffered']
    #allocation3 [shape = 's32[1]{0}', space=sflag, size = 0x4, scoped, tag = 'scoped memory for attention_forward.1']
    %9 = vsyncpa [#allocation3], 0
    // Predicated region
    $region2: #{attention_forward.1} parent=1 // pred_check
      _
    $region3: #{attention_forward.1} parent=1 // pred_check_branch
      %11 = sbr.rel (0) target = $region5
    $region4: #{attention_forward.1} parent=1 // pred_region
      _
    $region5: #{attention_forward.1} parent=1 // pred_fallthru
      _
    // Predicated region
    $region6: #{attention_forward.1} parent=1 // pred_check
      _
    $region7: #{attention_forward.1} parent=1 // pred_check_branch
      %13 = sbr.rel (0) target = $region9
    $region8: #{attention_forward.1} parent=1 // pred_region
      _
    $region9: #{attention_forward.1} parent=1 // pred_fallthru
      _
    // Predicated region
    $region10: #{attention_forward.1} parent=1 // pred_check
      _
    $region11: #{attention_forward.1} parent=1 // pred_check_branch
      %15 = sbr.rel (0) target = $region13
    $region12: #{attention_forward.1} parent=1 // pred_region
      _
    $region13: #{attention_forward.1} parent=1 // pred_fallthru
      _
    // Predicated region
    $region14: #{attention_forward.1} parent=1 // pred_check
      _
    $region15: #{attention_forward.1} parent=1 // pred_check_branch
      %17 = sbr.rel (0) target = $region17
    $region16: #{attention_forward.1} parent=1 // pred_region
      _
    $region17: #{attention_forward.1} parent=1 // pred_fallthru
      _
    %v18 = vld [vmem:[%s2] sm:$0xff]
    %v19 = vld [vmem:[%s2 + $0x8] sm:$0xff]
    %v20 = vld [vmem:[%s2 + $0x10] sm:$0xff]
    %v21 = vld [vmem:[%s2 + $0x18] sm:$0xff]
    %v22 = vld [vmem:[%s3] sm:$0xff]
    %v23 = vld [vmem:[%s3 + $0x8] sm:$0xff]
    %v24 = vld [vmem:[%s3 + $0x10] sm:$0xff]
    %v25 = vld [vmem:[%s3 + $0x18] sm:$0xff]
    %v26 = vld [vmem:[%s1] sm:$0x1]
    %v28 = vlaneseq
    %v29 = vshrl.u32 %v28, 7
    %v30 = vsub.s32 0, %v29
    %v31 = vrot.slane %v26, %v30
    %v33 = vmul.f32 %v18, %v31
    %v34 = vmul.f32 %v19, %v31
    %v35 = vmul.f32 %v20, %v31
    %v36 = vmul.f32 %v21, %v31
    %vm37 = vcmask 261120
    %v38 = vsel %vm37, %v33, 0.0
    %39 = vadd.xlane.f32.xlu0 %v38
    %v40 = vpop.xlane.xlu0 %39
    %v41 = vsel %vm37, %v34, 0.0
    %42 = vadd.xlane.f32.xlu0 %v41
    %v43 = vpop.xlane.xlu0 %42
    %v44 = vsel %vm37, %v35, 0.0
    %45 = vadd.xlane.f32.xlu0 %v44
    %v46 = vpop.xlane.xlu0 %45
    %v47 = vsel %vm37, %v36, 0.0
    %48 = vadd.xlane.f32.xlu0 %v47
    %v49 = vpop.xlane.xlu0 %48
    %v50 = vadd.f32 %v40, %v22
    %v51 = vadd.f32 %v43, %v23
    %v52 = vadd.f32 %v46, %v24
    %v53 = vadd.f32 %v49, %v25
    %v54 = vld [vmem:[%s0] sm:$0xff]
    %56 = vset.pattern.permute.xlu0 0
    %57 = vperm.xlu0 %56, %v50
    %v58 = vpop.permute.xlu0 %57
    %61 = vset.pattern.permute.xlu0 0
    %62 = vperm.xlu0 %61, %v51
    %v63 = vpop.permute.xlu0 %62
    %66 = vset.pattern.permute.xlu0 0
    %67 = vperm.xlu0 %66, %v52
    %v68 = vpop.permute.xlu0 %67
    %71 = vset.pattern.permute.xlu0 0
    %72 = vperm.xlu0 %71, %v53
    %v73 = vpop.permute.xlu0 %72
    %79 = vrot.lane.b32.xlu0 %v18, 96
    %v80 = vpop.permute.xlu0 %79
    %81 = vrot.lane.b32.xlu0 %v19, 96
    %v82 = vpop.permute.xlu0 %81
    %83 = vrot.lane.b32.xlu0 %v20, 96
    %v84 = vpop.permute.xlu0 %83
    %85 = vrot.lane.b32.xlu0 %v21, 96
    %v86 = vpop.permute.xlu0 %85
    %v87 = vsel %vm37, %v80, 0
    %v89 = vsel %vm37, %v82, 0
    %v91 = vsel %vm37, %v84, 0
    %v93 = vsel %vm37, %v86, 0
    %v96 = vsel %vm37, %v54, 0
    %98 = vmatprep.subr.mxu0 0.0
    %99 = vmatpush1.xpose.msra.mxu0 %v96
    %100 = vmatprep.subr.mxu0 0.0
    %101 = vmatpush1.xpose.msra.mxu0 0.0
    %102 = vmatprep.subr.mxu0 0.0
    %103 = vmatpush1.xpose.msra.mxu0 0.0
    %104 = vmatprep.subr.mxu0 0.0
    %105 = vmatpush1.xpose.msra.mxu0 0.0
    %106 = vmatprep.subr.mxu0 0.0
    %107 = vmatpush1.xpose.msra.mxu0 0.0
    %108 = vmatprep.subr.mxu0 0.0
    %109 = vmatpush1.xpose.msra.mxu0 0.0
    %110 = vmatprep.subr.mxu0 0.0
    %111 = vmatpush1.xpose.msra.mxu0 0.0
    %112 = vmatprep.subr.mxu0 0.0
    %113 = vmatpush1.xpose.msra.mxu0 0.0
    %114 = vmatprep.subr.mxu0 0.0
    %115 = vmatpush1.xpose.msra.mxu0 0.0
    %116 = vmatprep.subr.mxu0 0.0
    %117 = vmatpush1.xpose.msra.mxu0 0.0
    %118 = vmatprep.subr.mxu0 0.0
    %119 = vmatpush1.xpose.msra.mxu0 0.0
    %120 = vmatprep.subr.mxu0 0.0
    %121 = vmatpush1.xpose.msra.mxu0 0.0
    %122 = vmatprep.subr.mxu0 0.0
    %123 = vmatpush1.xpose.msra.mxu0 0.0
    %124 = vmatprep.subr.mxu0 0.0
    %125 = vmatpush1.xpose.msra.mxu0 0.0
    %126 = vmatprep.subr.mxu0 0.0
    %127 = vmatpush1.xpose.msra.mxu0 0.0
    %128 = vmatprep.subr.mxu0 0.0
    %129 = vmatpush1.xpose.msra.mxu0 0.0
    %130 = vmatprep.subr.mxu0 0.0
    %131 = vmatpush1.xpose.msra.mxu0 0.0
    %132 = vmatprep.subr.mxu0 0.0
    %133 = vmatpush1.xpose.msra.mxu0 0.0
    %134 = vmatprep.subr.mxu0 0.0
    %135 = vmatpush1.xpose.msra.mxu0 0.0
    %136 = vmatprep.subr.mxu0 0.0
    %137 = vmatpush1.xpose.msra.mxu0 0.0
    %138 = vmatprep.subr.mxu0 0.0
    %139 = vmatpush1.xpose.msra.mxu0 0.0
    %140 = vmatprep.subr.mxu0 0.0
    %141 = vmatpush1.xpose.msra.mxu0 0.0
    %142 = vmatprep.subr.mxu0 0.0
    %143 = vmatpush1.xpose.msra.mxu0 0.0
    %144 = vmatprep.subr.mxu0 0.0
    %145 = vmatpush1.xpose.msra.mxu0 0.0
    %146 = vmatprep.subr.mxu0 0.0
    %147 = vmatpush1.xpose.msra.mxu0 0.0
    %148 = vmatprep.subr.mxu0 0.0
    %149 = vmatpush1.xpose.msra.mxu0 0.0
    %150 = vmatprep.subr.mxu0 0.0
    %151 = vmatpush1.xpose.msra.mxu0 0.0
    %152 = vmatprep.subr.mxu0 0.0
    %153 = vmatpush1.xpose.msra.mxu0 0.0
    %154 = vmatprep.subr.mxu0 0.0
    %155 = vmatpush1.xpose.msra.mxu0 0.0
    %156 = vmatprep.subr.mxu0 0.0
    %157 = vmatpush1.xpose.msra.mxu0 0.0
    %158 = vmatprep.subr.mxu0 0.0
    %159 = vmatpush1.xpose.msra.mxu0 0.0
    %160 = vmatprep.subr.mxu0 0.0
    %161 = vmatpush1.xpose.msra.mxu0 0.0
    %162 = vmatprep.mubr.f32.mxu0 0.0
    %163 = vmatmul.mubr.f32.gmra.mrb[0].mxu0 %v87
    %v164 = vpop.f32.mrb[0].mxu0
    %v165 = vadd.f32 %v58, %v164
    %v166 = vpop.f32.mrb[0].mxu0
    %167 = vmatprep.mubr.f32.mxu0 0.0
    %168 = vmatmul.mubr.f32.gmra.mrb[0].mxu0 %v89
    %v169 = vpop.f32.mrb[0].mxu0
    %v170 = vadd.f32 %v63, %v169
    %v171 = vpop.f32.mrb[0].mxu0
    %172 = vmatprep.mubr.f32.mxu0 0.0
    %173 = vmatmul.mubr.f32.gmra.mrb[0].mxu0 %v91
    %v174 = vpop.f32.mrb[0].mxu0
    %v175 = vadd.f32 %v68, %v174
    %v176 = vpop.f32.mrb[0].mxu0
    %177 = vmatprep.mubr.f32.mxu0 0.0
    %178 = vmatmul.mubr.f32.gmra.mrb[0].mxu0 %v93
    %v179 = vpop.f32.mrb[0].mxu0
    %v180 = vadd.f32 %v73, %v179
    %v181 = vpop.f32.mrb[0].mxu0
    %182 = vdwg.mxu0
    %v183 = vtanh.pop %v165
    %v184 = vtanh.pop %v170
    %v185 = vtanh.pop %v175
    %v186 = vtanh.pop %v180
    %188 = vset.pattern.permute.xlu0 1
    %189 = vperm.xlu0 %188, %v22
    %v190 = vpop.permute.xlu0 %189
    %193 = vset.pattern.permute.xlu0 1
    %194 = vperm.xlu0 %193, %v23
    %v195 = vpop.permute.xlu0 %194
    %198 = vset.pattern.permute.xlu0 1
    %199 = vperm.xlu0 %198, %v24
    %v200 = vpop.permute.xlu0 %199
    %203 = vset.pattern.permute.xlu0 1
    %204 = vperm.xlu0 %203, %v25
    %v205 = vpop.permute.xlu0 %204
    %v207 = vmul.f32 %v183, %v190
    %v208 = vmul.f32 %v184, %v195
    %v209 = vmul.f32 %v185, %v200
    %v210 = vmul.f32 %v186, %v205
    %vm211 = vcmask 64512
    %v212 = vsel %vm211, %v207, 0.0
    %v213 = vsel %vm211, %v208, 0.0
    %v214 = vadd.f32 %v212, %v213
    %v215 = vsel %vm211, %v209, 0.0
    %v216 = vadd.f32 %v214, %v215
    %v217 = vsel %vm211, %v210, 0.0
    %v218 = vadd.f32 %v216, %v217
    %v219 = vrot.slane %v218, 4
    %v220 = vadd.f32 %v218, %v219
    %v221 = vrot.slane %v220, 2
    %v222 = vadd.f32 %v220, %v221
    %v223 = vrot.slane %v222, 1
    %v224 = vadd.f32 %v222, %v223
    %v225 = vsel %vm211, %v224, -inf
    %226 = vmax.xlane.f32.xlu0 %v225
    %v227 = vpop.xlane.xlu0 %226
    %v228 = vsub.f32 %v224, %v227
    %v229 = vmul.f32 %v228, 1.442695
    %v230 = vpow.pop %v229
    %v231 = vsel %vm211, %v230, 0.0
    %232 = vadd.xlane.f32.xlu0 %v231
    %v233 = vpop.xlane.xlu0 %232
    %v234 = vrcp.pop %v233
    %v235 = vmul.f32 %v230, %v234
    %vm236 = vcmask 57344
    %237 = vst.msk [vmem:[#allocation2] sm:$0x1] %vm236, %v235
    // Predicated region
    $region18: #{attention_forward.1} parent=1 // pred_check
      _
    $region19: #{attention_forward.1} parent=1 // pred_check_branch
      %239 = sbr.rel (0) target = $region21
    $region20: #{attention_forward.1} parent=1 // pred_region
      %s241 = ssub.s32 16, 16
      %242 = vsyncadd [#allocation3], %s241
      %s244 = sshll.u32 [#allocation2], 4
      %s245 = int_to_ptr.vmem [resolvable:$true] %s244
      %247 = dma.vmem_to_hbm [thread:$0]  %s245, 16, %s4, [#allocation3]
    $region21: #{attention_forward.1} parent=1 // pred_fallthru
      _
    // Predicated region
    $region22: #{attention_forward.1} parent=1 // pred_check
      _
    $region23: #{attention_forward.1} parent=1 // pred_check_branch
      %249 = sbr.rel (0) target = $region25
    $region24: #{attention_forward.1} parent=1 // pred_region
      %250 = dma.done [#allocation3], 16
    $region25: #{attention_forward.1} parent=1 // pred_fallthru
      _
    %251 = vsyncpa [#allocation3], 1

</llo_original>
